<compile_context>
chip_gen: v5e
topology: v5e:2x2
jax: 0.10.0
libtpu: 0.0.40
codegen_flags: <defaults>
</compile_context>

<pallas_src>
import jax
import jax.numpy as jnp
from jax import lax
from jax.experimental import pallas as pl
from jax.experimental.pallas import tpu as pltpu


def _round_up(x, m):
    return ((x + m - 1) // m) * m


def _mm(x, w):
    # x: (B, in), w: (out, in)  ->  (B, out); contract last dims, no transpose.
    return lax.dot_general(
        x, w,
        dimension_numbers=(((1,), (1,)), ((), ())),
        preferred_element_type=jnp.float32,
    )


def _fr_kernel(feat_ref, noise_ref,
               w1_ref, b1_ref,
               w3mu_ref, b3mu_ref, w3std_ref, b3std_ref,
               wd_ref, bd_ref, wc_ref, bc_ref,
               mus_ref, stds_ref, dis_ref, pred_ref, enc_ref, h_ref):
    feat = feat_ref[...]

    # fc1 + LeakyReLU(0.2)
    h1 = _mm(feat, w1_ref[...]) + b1_ref[...]
    hidden = jnp.maximum(h1, 0.2 * h1)

    # fc3 split into two lane-aligned heads (mus / stds)
    mus = _mm(hidden, w3mu_ref[...]) + b3mu_ref[...]
    stds_logit = _mm(hidden, w3std_ref[...]) + b3std_ref[...]
    stds = jax.nn.sigmoid(stds_logit)

    # reparameterization: randn_like(mu) * sigma + mu
    encoder_out = noise_ref[...] * stds + mus

    # discriminator (out_features == 1): VPU broadcast-mul + row reduction
    dis = jnp.sum(encoder_out * wd_ref[...], axis=1, keepdims=True) + bd_ref[...]

    # classifier on mus + log_softmax(dim=1)
    logits = _mm(mus, wc_ref[...]) + bc_ref[...]
    m = jnp.max(logits, axis=1, keepdims=True)
    shifted = logits - m
    lse = jnp.log(jnp.sum(jnp.exp(shifted), axis=1, keepdims=True))
    pred = shifted - lse

    h_out = jax.nn.sigmoid(encoder_out)

    mus_ref[...] = mus
    stds_ref[...] = stds
    dis_ref[...] = dis
    pred_ref[...] = pred
    enc_ref[...] = encoder_out
    h_ref[...] = h_out


def fr_forward(feat, noise, params, att_size, seen_class_num, *, tb=128):
    """feat: (B, resSize) f32; noise: (B, attSize) f32 standard normal."""
    B, res_size = feat.shape
    w1, b1, w3, b3, wd, bd, wc, bc = params
    ngh = w1.shape[0]

    # Split fc3 into mu / std halves in the wrapper (zero cost; avoids an in-kernel
    # column slice that crosses lane boundaries when att_size % 128 != 0).
    w3_mu, w3_std = w3[:att_size], w3[att_size:]
    b3_mu, b3_std = b3[:att_size], b3[att_size:]

    # Biases as (1, N) 2-D arrays -> clean sublane-broadcast add inside the kernel.
    b1_2d = b1.reshape(1, ngh)
    b3mu_2d = b3_mu.reshape(1, att_size)
    b3std_2d = b3_std.reshape(1, att_size)
    bd_2d = bd.reshape(1, 1)
    bc_2d = bc.reshape(1, seen_class_num)

    # Batch tile: multiple of 8 (f32 sublanes), capped at the padded batch.
    tb = max(8, min(tb, _round_up(B, 8)))
    b_pad = _round_up(B, tb)
    if b_pad != B:
        pad = b_pad - B
        feat = jnp.pad(feat, ((0, pad), (0, 0)))
        noise = jnp.pad(noise, ((0, pad), (0, 0)))

    grid = (b_pad // tb,)

    def row_spec(cols):
        # Batch-tiled activation / output block.
        return pl.BlockSpec((tb, cols), lambda i: (i, 0))

    def resident_spec(shape):
        # Constant block index -> weight stays resident in VMEM across grid steps.
        return pl.BlockSpec(shape, lambda i: (0, 0))

    in_specs = [
        row_spec(res_size),            # feat
        row_spec(att_size),            # noise
        resident_spec(w1.shape),       # w1   (ngh, resSize)
        resident_spec((1, ngh)),       # b1
        resident_spec(w3_mu.shape),    # w3_mu (attSize, ngh)
        resident_spec((1, att_size)),  # b3_mu
        resident_spec(w3_std.shape),   # w3_std (attSize, ngh)
        resident_spec((1, att_size)),  # b3_std
        resident_spec(wd.shape),       # wd (1, attSize)
        resident_spec((1, 1)),         # bd
        resident_spec(wc.shape),       # wc (seen_class_num, attSize)
        resident_spec((1, seen_class_num)),  # bc
    ]
    out_specs = [
        row_spec(att_size),            # mus
        row_spec(att_size),            # stds
        row_spec(1),                   # dis_out
        row_spec(seen_class_num),      # pred
        row_spec(att_size),            # encoder_out
        row_spec(att_size),            # h
    ]
    out_shapes = (
        jax.ShapeDtypeStruct((b_pad, att_size), jnp.float32),        # mus
        jax.ShapeDtypeStruct((b_pad, att_size), jnp.float32),        # stds
        jax.ShapeDtypeStruct((b_pad, 1), jnp.float32),               # dis_out
        jax.ShapeDtypeStruct((b_pad, seen_class_num), jnp.float32),  # pred
        jax.ShapeDtypeStruct((b_pad, att_size), jnp.float32),        # encoder_out
        jax.ShapeDtypeStruct((b_pad, att_size), jnp.float32),        # h
    )

    outs = pl.pallas_call(
        _fr_kernel,
        out_shape=out_shapes,
        grid_spec=pltpu.PrefetchScalarGridSpec(
            num_scalar_prefetch=0,
            grid=grid,
            in_specs=in_specs,
            out_specs=out_specs,
        ),
        compiler_params=pltpu.CompilerParams(
            dimension_semantics=("parallel",),
            vmem_limit_bytes=32 * 1024 * 1024,
        ),
    )(feat, noise, w1, b1_2d, w3_mu, b3mu_2d, w3_std, b3std_2d,
      wd, bd_2d, wc, bc_2d)

    if b_pad != B:
        outs = tuple(o[:B] for o in outs)
    return outs


def init_params(key, res_size, ngh, att_size, seen_class_num):
    """weights_init: Linear weight ~ N(0, 0.02), bias = 0 (PyTorch (out,in) layout)."""
    k1, k3, kd, kc = jax.random.split(key, 4)
    w1 = 0.02 * jax.random.normal(k1, (ngh, res_size), jnp.float32)
    b1 = jnp.zeros((ngh,), jnp.float32)
    w3 = 0.02 * jax.random.normal(k3, (att_size * 2, ngh), jnp.float32)
    b3 = jnp.zeros((att_size * 2,), jnp.float32)
    wd = 0.02 * jax.random.normal(kd, (1, att_size), jnp.float32)
    bd = jnp.zeros((1,), jnp.float32)
    wc = 0.02 * jax.random.normal(kc, (seen_class_num, att_size), jnp.float32)
    bc = jnp.zeros((seen_class_num,), jnp.float32)
    return (w1, b1, w3, b3, wd, bd, wc, bc)


if __name__ == "__main__":
    # Small, forward-consistent shapes.
    B = 8              # batch
    RES_SIZE = 32      # opt.resSize
    NGH = 64           # opt.ngh
    ATT_SIZE = 16      # opt.attSize
    SEEN_CLASSES = 10  # opt.seen_class_num

    root = jax.random.PRNGKey(0)
    k_feat, k_noise, k_params = jax.random.split(root, 3)

    feat = jax.random.normal(k_feat, (B, RES_SIZE), jnp.float32)
    noise = jax.random.normal(k_noise, (B, ATT_SIZE), jnp.float32)  # reparam noise
    params = init_params(k_params, RES_SIZE, NGH, ATT_SIZE, SEEN_CLASSES)

    mus, stds, dis_out, pred, encoder_out, h = jax.block_until_ready(
        fr_forward(feat, noise, params, ATT_SIZE, SEEN_CLASSES))

    assert mus.shape == (B, ATT_SIZE)
    assert stds.shape == (B, ATT_SIZE)
    assert dis_out.shape == (B, 1)
    assert pred.shape == (B, SEEN_CLASSES)
    assert encoder_out.shape == (B, ATT_SIZE)
    assert h.shape == (B, ATT_SIZE)

    # Basic sanity: stds/h in (0,1), log_softmax rows sum to ~1 after exp.
    assert bool(jnp.all((stds > 0) & (stds < 1)))
    assert bool(jnp.allclose(jnp.sum(jnp.exp(pred), axis=1), 1.0, atol=1e-3))

    # TODO(synk): train_G=True branch (discriminator on mus instead of encoder_out)
    # is a trivial variant and is not wired into this train_G=False forward kernel.
    print("KERNEL_OK")
</pallas_src>

<mosaic_0001>
module attributes {stable_mosaic.version = 11 : i64} {
  func.func @_fr_kernel(%arg0: i32, %arg1: memref<8x32xf32, #tpu.memory_space<vmem>>, %arg2: memref<8x16xf32, #tpu.memory_space<vmem>>, %arg3: memref<64x32xf32, #tpu.memory_space<vmem>>, %arg4: memref<1x64xf32, #tpu.memory_space<vmem>>, %arg5: memref<16x64xf32, #tpu.memory_space<vmem>>, %arg6: memref<1x16xf32, #tpu.memory_space<vmem>>, %arg7: memref<16x64xf32, #tpu.memory_space<vmem>>, %arg8: memref<1x16xf32, #tpu.memory_space<vmem>>, %arg9: memref<1x16xf32, #tpu.memory_space<vmem>>, %arg10: memref<1x1xf32, #tpu.memory_space<vmem>>, %arg11: memref<10x16xf32, #tpu.memory_space<vmem>>, %arg12: memref<1x10xf32, #tpu.memory_space<vmem>>, %arg13: memref<8x16xf32, #tpu.memory_space<vmem>>, %arg14: memref<8x16xf32, #tpu.memory_space<vmem>>, %arg15: memref<8x1xf32, #tpu.memory_space<vmem>>, %arg16: memref<8x10xf32, #tpu.memory_space<vmem>>, %arg17: memref<8x16xf32, #tpu.memory_space<vmem>>, %arg18: memref<8x16xf32, #tpu.memory_space<vmem>>) attributes {dimension_semantics = [#tpu.dimension_semantics<parallel>], iteration_bounds = array<i64: 1>, scalar_prefetch = 0 : i64, scratch_operands = 0 : i64, tpu.core_type = #tpu.core_type<tc>, window_params = [{transform_indices = @transform_0, window_bounds = array<i64: 8, 32>}, {transform_indices = @transform_1, window_bounds = array<i64: 8, 16>}, {pipeline_mode = #tpu.pipeline_mode<synchronous>, transform_indices = @transform_2, window_bounds = array<i64: 64, 32>}, {pipeline_mode = #tpu.pipeline_mode<synchronous>, transform_indices = @transform_3, window_bounds = array<i64: 1, 64>}, {pipeline_mode = #tpu.pipeline_mode<synchronous>, transform_indices = @transform_4, window_bounds = array<i64: 16, 64>}, {pipeline_mode = #tpu.pipeline_mode<synchronous>, transform_indices = @transform_5, window_bounds = array<i64: 1, 16>}, {pipeline_mode = #tpu.pipeline_mode<synchronous>, transform_indices = @transform_6, window_bounds = array<i64: 16, 64>}, {pipeline_mode = #tpu.pipeline_mode<synchronous>, transform_indices = @transform_7, window_bounds = array<i64: 1, 16>}, {pipeline_mode = #tpu.pipeline_mode<synchronous>, transform_indices = @transform_8, window_bounds = array<i64: 1, 16>}, {pipeline_mode = #tpu.pipeline_mode<synchronous>, transform_indices = @transform_9, window_bounds = array<i64: 1, 1>}, {pipeline_mode = #tpu.pipeline_mode<synchronous>, transform_indices = @transform_10, window_bounds = array<i64: 10, 16>}, {pipeline_mode = #tpu.pipeline_mode<synchronous>, transform_indices = @transform_11, window_bounds = array<i64: 1, 10>}, {transform_indices = @transform_12, window_bounds = array<i64: 8, 16>}, {transform_indices = @transform_13, window_bounds = array<i64: 8, 16>}, {transform_indices = @transform_14, window_bounds = array<i64: 8, 1>}, {transform_indices = @transform_15, window_bounds = array<i64: 8, 10>}, {transform_indices = @transform_16, window_bounds = array<i64: 8, 16>}, {transform_indices = @transform_17, window_bounds = array<i64: 8, 16>}]} {
    %c0 = arith.constant 0 : index
    %c0_0 = arith.constant 0 : index
    %0 = vector.load %arg1[%c0, %c0_0] : memref<8x32xf32, #tpu.memory_space<vmem>>, vector<8x32xf32>
    %c0_1 = arith.constant 0 : index
    %c0_2 = arith.constant 0 : index
    %1 = vector.load %arg3[%c0_1, %c0_2] : memref<64x32xf32, #tpu.memory_space<vmem>>, vector<64x32xf32>
    %cst = arith.constant dense<0.000000e+00> : vector<8x64xf32>
    %2 = tpu.matmul %0, %1, %cst {dimension_numbers = #tpu.dot_dimension_numbers<[1], [1], [0], [0], [0, 0, 1, 0], [], []>} : vector<8x32xf32>, vector<64x32xf32>, vector<8x64xf32> -> vector<8x64xf32>
    %c0_3 = arith.constant 0 : index
    %c0_4 = arith.constant 0 : index
    %3 = vector.load %arg4[%c0_3, %c0_4] : memref<1x64xf32, #tpu.memory_space<vmem>>, vector<1x64xf32>
    %4 = vector.broadcast %3 : vector<1x64xf32> to vector<8x64xf32>
    %5 = arith.addf %2, %4 : vector<8x64xf32>
    %cst_5 = arith.constant 2.000000e-01 : f32
    %6 = vector.broadcast %cst_5 : f32 to vector<8x64xf32>
    %7 = arith.mulf %6, %5 : vector<8x64xf32>
    %8 = arith.maximumf %5, %7 : vector<8x64xf32>
    %c0_6 = arith.constant 0 : index
    %c0_7 = arith.constant 0 : index
    %9 = vector.load %arg5[%c0_6, %c0_7] : memref<16x64xf32, #tpu.memory_space<vmem>>, vector<16x64xf32>
    %cst_8 = arith.constant dense<0.000000e+00> : vector<8x16xf32>
    %10 = tpu.matmul %8, %9, %cst_8 {dimension_numbers = #tpu.dot_dimension_numbers<[1], [1], [0], [0], [0, 0, 1, 0], [], []>} : vector<8x64xf32>, vector<16x64xf32>, vector<8x16xf32> -> vector<8x16xf32>
    %c0_9 = arith.constant 0 : index
    %c0_10 = arith.constant 0 : index
    %11 = vector.load %arg6[%c0_9, %c0_10] : memref<1x16xf32, #tpu.memory_space<vmem>>, vector<1x16xf32>
    %12 = vector.broadcast %11 : vector<1x16xf32> to vector<8x16xf32>
    %13 = arith.addf %10, %12 : vector<8x16xf32>
    %c0_11 = arith.constant 0 : index
    %c0_12 = arith.constant 0 : index
    %14 = vector.load %arg7[%c0_11, %c0_12] : memref<16x64xf32, #tpu.memory_space<vmem>>, vector<16x64xf32>
    %cst_13 = arith.constant dense<0.000000e+00> : vector<8x16xf32>
    %15 = tpu.matmul %8, %14, %cst_13 {dimension_numbers = #tpu.dot_dimension_numbers<[1], [1], [0], [0], [0, 0, 1, 0], [], []>} : vector<8x64xf32>, vector<16x64xf32>, vector<8x16xf32> -> vector<8x16xf32>
    %c0_14 = arith.constant 0 : index
    %c0_15 = arith.constant 0 : index
    %16 = vector.load %arg8[%c0_14, %c0_15] : memref<1x16xf32, #tpu.memory_space<vmem>>, vector<1x16xf32>
    %17 = vector.broadcast %16 : vector<1x16xf32> to vector<8x16xf32>
    %18 = arith.addf %15, %17 : vector<8x16xf32>
    %19 = arith.negf %18 : vector<8x16xf32>
    %20 = math.exp %19 : vector<8x16xf32>
    %cst_16 = arith.constant 1.000000e+00 : f32
    %21 = vector.broadcast %cst_16 : f32 to vector<8x16xf32>
    %22 = arith.addf %21, %20 : vector<8x16xf32>
    %23 = arith.divf %21, %22 : vector<8x16xf32>
    %c0_17 = arith.constant 0 : index
    %c0_18 = arith.constant 0 : index
    %24 = vector.load %arg2[%c0_17, %c0_18] : memref<8x16xf32, #tpu.memory_space<vmem>>, vector<8x16xf32>
    %25 = arith.mulf %24, %23 : vector<8x16xf32>
    %26 = arith.addf %25, %13 : vector<8x16xf32>
    %c0_19 = arith.constant 0 : index
    %c0_20 = arith.constant 0 : index
    %27 = vector.load %arg9[%c0_19, %c0_20] : memref<1x16xf32, #tpu.memory_space<vmem>>, vector<1x16xf32>
    %28 = vector.broadcast %27 : vector<1x16xf32> to vector<8x16xf32>
    %29 = arith.mulf %26, %28 : vector<8x16xf32>
    %cst_21 = arith.constant dense<0.000000e+00> : vector<8xf32>
    %30 = vector.multi_reduction <add>, %29, %cst_21 [1] : vector<8x16xf32> to vector<8xf32>
    %31 = vector.shape_cast %30 : vector<8xf32> to vector<8x1xf32>
    %c0_22 = arith.constant 0 : index
    %c0_23 = arith.constant 0 : index
    %32 = vector.load %arg10[%c0_22, %c0_23] : memref<1x1xf32, #tpu.memory_space<vmem>>, vector<1x1xf32>
    %33 = vector.broadcast %32 : vector<1x1xf32> to vector<8x1xf32>
    %34 = arith.addf %31, %33 : vector<8x1xf32>
    %c0_24 = arith.constant 0 : index
    %c0_25 = arith.constant 0 : index
    %35 = vector.load %arg11[%c0_24, %c0_25] : memref<10x16xf32, #tpu.memory_space<vmem>>, vector<10x16xf32>
    %cst_26 = arith.constant dense<0.000000e+00> : vector<8x10xf32>
    %36 = tpu.matmul %13, %35, %cst_26 {dimension_numbers = #tpu.dot_dimension_numbers<[1], [1], [0], [0], [0, 0, 1, 0], [], []>} : vector<8x16xf32>, vector<10x16xf32>, vector<8x10xf32> -> vector<8x10xf32>
    %c0_27 = arith.constant 0 : index
    %c0_28 = arith.constant 0 : index
    %37 = vector.load %arg12[%c0_27, %c0_28] : memref<1x10xf32, #tpu.memory_space<vmem>>, vector<1x10xf32>
    %38 = vector.broadcast %37 : vector<1x10xf32> to vector<8x10xf32>
    %39 = arith.addf %36, %38 : vector<8x10xf32>
    %cst_29 = arith.constant dense<0xFF800000> : vector<8xf32>
    %40 = vector.multi_reduction <maximumf>, %39, %cst_29 [1] : vector<8x10xf32> to vector<8xf32>
    %41 = vector.shape_cast %40 : vector<8xf32> to vector<8x1xf32>
    %42 = vector.broadcast %41 : vector<8x1xf32> to vector<8x10xf32>
    %43 = arith.subf %39, %42 : vector<8x10xf32>
    %44 = math.exp %43 : vector<8x10xf32>
    %cst_30 = arith.constant dense<0.000000e+00> : vector<8xf32>
    %45 = vector.multi_reduction <add>, %44, %cst_30 [1] : vector<8x10xf32> to vector<8xf32>
    %46 = vector.shape_cast %45 : vector<8xf32> to vector<8x1xf32>
    %47 = math.log %46 : vector<8x1xf32>
    %48 = vector.broadcast %47 : vector<8x1xf32> to vector<8x10xf32>
    %49 = arith.subf %43, %48 : vector<8x10xf32>
    %50 = arith.negf %26 : vector<8x16xf32>
    %51 = math.exp %50 : vector<8x16xf32>
    %cst_31 = arith.constant 1.000000e+00 : f32
    %52 = vector.broadcast %cst_31 : f32 to vector<8x16xf32>
    %53 = arith.addf %52, %51 : vector<8x16xf32>
    %54 = arith.divf %52, %53 : vector<8x16xf32>
    %c0_32 = arith.constant 0 : index
    %c0_33 = arith.constant 0 : index
    %55 = vector.load %arg13[%c0_32, %c0_33] : memref<8x16xf32, #tpu.memory_space<vmem>>, vector<8x16xf32>
    tpu.vector_store %arg13[%c0_32, %c0_33], %13 {strides = array<i32>} : memref<8x16xf32, #tpu.memory_space<vmem>>, vector<8x16xf32>,
    %c0_34 = arith.constant 0 : index
    %c0_35 = arith.constant 0 : index
    %56 = vector.load %arg14[%c0_34, %c0_35] : memref<8x16xf32, #tpu.memory_space<vmem>>, vector<8x16xf32>
    tpu.vector_store %arg14[%c0_34, %c0_35], %23 {strides = array<i32>} : memref<8x16xf32, #tpu.memory_space<vmem>>, vector<8x16xf32>,
    %c0_36 = arith.constant 0 : index
    %c0_37 = arith.constant 0 : index
    %57 = vector.load %arg15[%c0_36, %c0_37] : memref<8x1xf32, #tpu.memory_space<vmem>>, vector<8x1xf32>
    tpu.vector_store %arg15[%c0_36, %c0_37], %34 {strides = array<i32>} : memref<8x1xf32, #tpu.memory_space<vmem>>, vector<8x1xf32>,
    %c0_38 = arith.constant 0 : index
    %c0_39 = arith.constant 0 : index
    %58 = vector.load %arg16[%c0_38, %c0_39] : memref<8x10xf32, #tpu.memory_space<vmem>>, vector<8x10xf32>
    tpu.vector_store %arg16[%c0_38, %c0_39], %49 {strides = array<i32>} : memref<8x10xf32, #tpu.memory_space<vmem>>, vector<8x10xf32>,
    %c0_40 = arith.constant 0 : index
    %c0_41 = arith.constant 0 : index
    %59 = vector.load %arg17[%c0_40, %c0_41] : memref<8x16xf32, #tpu.memory_space<vmem>>, vector<8x16xf32>
    tpu.vector_store %arg17[%c0_40, %c0_41], %26 {strides = array<i32>} : memref<8x16xf32, #tpu.memory_space<vmem>>, vector<8x16xf32>,
    %c0_42 = arith.constant 0 : index
    %c0_43 = arith.constant 0 : index
    %60 = vector.load %arg18[%c0_42, %c0_43] : memref<8x16xf32, #tpu.memory_space<vmem>>, vector<8x16xf32>
    tpu.vector_store %arg18[%c0_42, %c0_43], %54 {strides = array<i32>} : memref<8x16xf32, #tpu.memory_space<vmem>>, vector<8x16xf32>,
    return
  }
  func.func @transform_0(%arg0: i32) -> (i32, i32) {
    %c0_i32 = arith.constant 0 : i32
    %c0_i32_0 = arith.constant 0 : i32
    return %arg0, %c0_i32 : i32, i32
  }
  func.func @transform_1(%arg0: i32) -> (i32, i32) {
    %c0_i32 = arith.constant 0 : i32
    %c0_i32_0 = arith.constant 0 : i32
    return %arg0, %c0_i32 : i32, i32
  }
  func.func @transform_2(%arg0: i32) -> (i32, i32) {
    %c0_i32 = arith.constant 0 : i32
    %c0_i32_0 = arith.constant 0 : i32
    %c0_i32_1 = arith.constant 0 : i32
    return %c0_i32, %c0_i32_0 : i32, i32
  }
  func.func @transform_3(%arg0: i32) -> (i32, i32) {
    %c0_i32 = arith.constant 0 : i32
    %c0_i32_0 = arith.constant 0 : i32
    %c0_i32_1 = arith.constant 0 : i32
    return %c0_i32, %c0_i32_0 : i32, i32
  }
  func.func @transform_4(%arg0: i32) -> (i32, i32) {
    %c0_i32 = arith.constant 0 : i32
    %c0_i32_0 = arith.constant 0 : i32
    %c0_i32_1 = arith.constant 0 : i32
    return %c0_i32, %c0_i32_0 : i32, i32
  }
  func.func @transform_5(%arg0: i32) -> (i32, i32) {
    %c0_i32 = arith.constant 0 : i32
    %c0_i32_0 = arith.constant 0 : i32
    %c0_i32_1 = arith.constant 0 : i32
    return %c0_i32, %c0_i32_0 : i32, i32
  }
  func.func @transform_6(%arg0: i32) -> (i32, i32) {
    %c0_i32 = arith.constant 0 : i32
    %c0_i32_0 = arith.constant 0 : i32
    %c0_i32_1 = arith.constant 0 : i32
    return %c0_i32, %c0_i32_0 : i32, i32
  }
  func.func @transform_7(%arg0: i32) -> (i32, i32) {
    %c0_i32 = arith.constant 0 : i32
    %c0_i32_0 = arith.constant 0 : i32
    %c0_i32_1 = arith.constant 0 : i32
    return %c0_i32, %c0_i32_0 : i32, i32
  }
  func.func @transform_8(%arg0: i32) -> (i32, i32) {
    %c0_i32 = arith.constant 0 : i32
    %c0_i32_0 = arith.constant 0 : i32
    %c0_i32_1 = arith.constant 0 : i32
    return %c0_i32, %c0_i32_0 : i32, i32
  }
  func.func @transform_9(%arg0: i32) -> (i32, i32) {
    %c0_i32 = arith.constant 0 : i32
    %c0_i32_0 = arith.constant 0 : i32
    %c0_i32_1 = arith.constant 0 : i32
    return %c0_i32, %c0_i32_0 : i32, i32
  }
  func.func @transform_10(%arg0: i32) -> (i32, i32) {
    %c0_i32 = arith.constant 0 : i32
    %c0_i32_0 = arith.constant 0 : i32
    %c0_i32_1 = arith.constant 0 : i32
    return %c0_i32, %c0_i32_0 : i32, i32
  }
  func.func @transform_11(%arg0: i32) -> (i32, i32) {
    %c0_i32 = arith.constant 0 : i32
    %c0_i32_0 = arith.constant 0 : i32
    %c0_i32_1 = arith.constant 0 : i32
    return %c0_i32, %c0_i32_0 : i32, i32
  }
  func.func @transform_12(%arg0: i32) -> (i32, i32) {
    %c0_i32 = arith.constant 0 : i32
    %c0_i32_0 = arith.constant 0 : i32
    return %arg0, %c0_i32 : i32, i32
  }
  func.func @transform_13(%arg0: i32) -> (i32, i32) {
    %c0_i32 = arith.constant 0 : i32
    %c0_i32_0 = arith.constant 0 : i32
    return %arg0, %c0_i32 : i32, i32
  }
  func.func @transform_14(%arg0: i32) -> (i32, i32) {
    %c0_i32 = arith.constant 0 : i32
    %c0_i32_0 = arith.constant 0 : i32
    return %arg0, %c0_i32 : i32, i32
  }
  func.func @transform_15(%arg0: i32) -> (i32, i32) {
    %c0_i32 = arith.constant 0 : i32
    %c0_i32_0 = arith.constant 0 : i32
    return %arg0, %c0_i32 : i32, i32
  }
  func.func @transform_16(%arg0: i32) -> (i32, i32) {
    %c0_i32 = arith.constant 0 : i32
    %c0_i32_0 = arith.constant 0 : i32
    return %arg0, %c0_i32 : i32, i32
  }
  func.func @transform_17(%arg0: i32) -> (i32, i32) {
    %c0_i32 = arith.constant 0 : i32
    %c0_i32_0 = arith.constant 0 : i32
    return %arg0, %c0_i32 : i32, i32
  }
}

</mosaic_0001>

<llo_original>
// kernel: tpu_custom_call.1
$region0: #{tpu_custom_call.1}
  #allocation0 [shape = 'u32[]', space=smem, size = 0x4, offset = 0x4, fixed_abs, tag = 'smem constant byte address 0x4 - core index']
  #allocation1 [shape = 'u32[72,128]{1,0:T(1,128)}', space=vmem, size = 0x9000, scoped, tag = 'internal scratch']
  #allocation2 [shape = 'f32[1,1]{1,0:T(1,128)S(1)}', space=vmem, size = 0x200, scoped, tag = 'scoped memory for tpu_custom_call.1']
  %s0 = inlined_call_operand.vmem [shape: f32[8,32], index: 0, kind: input, shape index: {}]
  %s1 = inlined_call_operand.vmem [shape: f32[8,16], index: 1, kind: input, shape index: {}]
  %s2 = inlined_call_operand.vmem [shape: f32[64,32], index: 2, kind: input, shape index: {}]
  %s3 = inlined_call_operand.vmem [shape: f32[1,64], index: 3, kind: input, shape index: {}]
  %s4 = inlined_call_operand.vmem [shape: f32[16,64], index: 4, kind: input, shape index: {}]
  %s5 = inlined_call_operand.vmem [shape: f32[1,16], index: 5, kind: input, shape index: {}]
  %s6 = inlined_call_operand.vmem [shape: f32[16,64], index: 6, kind: input, shape index: {}]
  %s7 = inlined_call_operand.vmem [shape: f32[1,16], index: 7, kind: input, shape index: {}]
  %s8 = inlined_call_operand.vmem [shape: f32[1,16], index: 8, kind: input, shape index: {}]
  %s9 = inlined_call_operand.<no memory space> [shape: f32[1,1], index: 9, kind: input, shape index: {}]
  %s10 = inlined_call_operand.vmem [shape: f32[10,16], index: 10, kind: input, shape index: {}]
  %s11 = inlined_call_operand.vmem [shape: f32[1,10], index: 11, kind: input, shape index: {}]
  %s12 = inlined_call_operand.hbm [shape: f32[8,16], index: 12, kind: output, shape index: {0}]
  %s13 = inlined_call_operand.hbm [shape: f32[8,16], index: 13, kind: output, shape index: {1}]
  %s14 = inlined_call_operand.vmem [shape: f32[8,1], index: 14, kind: output, shape index: {2}]
  %s15 = inlined_call_operand.hbm [shape: f32[8,10], index: 15, kind: output, shape index: {3}]
  %s16 = inlined_call_operand.hbm [shape: f32[8,16], index: 16, kind: output, shape index: {4}]
  %s17 = inlined_call_operand.hbm [shape: f32[8,16], index: 17, kind: output, shape index: {5}]
  %18 = xla_tuple %s12, %s13, %s14, %s15, %s16, %s17
  %s19 = sld [smem:[#allocation0]]
  $region98: #{tpu_custom_call.1} parent=0
    _
  %s21 = ssub.s32 1, %s19
  %s22 = scalar_select 0, %s21, %s19
  %v23 = vstv %s9
  %24 = vst [vmem:[#allocation2] sm:$0x1] %v23
  $region1: #{tpu_custom_call.1} parent=0
    #allocation3 [shape = 'u8[4096]{0}', space=vmem, size = 0x1000, scoped, tag = 'output window, operand 0, single buffered']
    #allocation4 [shape = 's32[1]{0}', space=sflag, size = 0x4, scoped, tag = 'scoped memory for tpu_custom_call.1']
    #allocation5 [shape = 'u8[4096]{0}', space=vmem, size = 0x1000, scoped, tag = 'output window, operand 1, single buffered']
    #allocation6 [shape = 's32[1]{0}', space=sflag, size = 0x4, scoped, tag = 'scoped memory for tpu_custom_call.1']
    #allocation7 [shape = 'u8[4096]{0}', space=vmem, size = 0x1000, scoped, tag = 'output window, operand 3, single buffered']
    #allocation8 [shape = 'u8[4096]{0}', space=vmem, size = 0x1000, scoped, tag = 'output window, operand 4, single buffered']
    #allocation9 [shape = 's32[1]{0}', space=sflag, size = 0x4, scoped, tag = 'scoped memory for tpu_custom_call.1']
    #allocation10 [shape = 'u8[4096]{0}', space=vmem, size = 0x1000, scoped, tag = 'output window, operand 5, single buffered']
    %25 = vsyncpa [#allocation4], 0
    %26 = vsyncpa [#allocation6], 0
    %27 = vsyncpa [#allocation9], 0
    // Predicated region
    $region2: #{tpu_custom_call.1} parent=1 // pred_check
      _
    $region3: #{tpu_custom_call.1} parent=1 // pred_check_branch
      %29 = sbr.rel (0) target = $region5
    $region4: #{tpu_custom_call.1} parent=1 // pred_region
      _
    $region5: #{tpu_custom_call.1} parent=1 // pred_fallthru
      _
    // Predicated region
    $region6: #{tpu_custom_call.1} parent=1 // pred_check
      _
    $region7: #{tpu_custom_call.1} parent=1 // pred_check_branch
      %31 = sbr.rel (0) target = $region9
    $region8: #{tpu_custom_call.1} parent=1 // pred_region
      _
    $region9: #{tpu_custom_call.1} parent=1 // pred_fallthru
      _
    // Predicated region
    $region10: #{tpu_custom_call.1} parent=1 // pred_check
      _
    $region11: #{tpu_custom_call.1} parent=1 // pred_check_branch
      %33 = sbr.rel (0) target = $region13
    $region12: #{tpu_custom_call.1} parent=1 // pred_region
      _
    $region13: #{tpu_custom_call.1} parent=1 // pred_fallthru
      _
    // Predicated region
    $region14: #{tpu_custom_call.1} parent=1 // pred_check
      _
    $region15: #{tpu_custom_call.1} parent=1 // pred_check_branch
      %35 = sbr.rel (0) target = $region17
    $region16: #{tpu_custom_call.1} parent=1 // pred_region
      _
    $region17: #{tpu_custom_call.1} parent=1 // pred_fallthru
      _
    // Predicated region
    $region18: #{tpu_custom_call.1} parent=1 // pred_check
      _
    $region19: #{tpu_custom_call.1} parent=1 // pred_check_branch
      %37 = sbr.rel (0) target = $region21
    $region20: #{tpu_custom_call.1} parent=1 // pred_region
      _
    $region21: #{tpu_custom_call.1} parent=1 // pred_fallthru
      _
    // Predicated region
    $region22: #{tpu_custom_call.1} parent=1 // pred_check
      _
    $region23: #{tpu_custom_call.1} parent=1 // pred_check_branch
      %39 = sbr.rel (0) target = $region25
    $region24: #{tpu_custom_call.1} parent=1 // pred_region
      _
    $region25: #{tpu_custom_call.1} parent=1 // pred_fallthru
      _
    // Predicated region
    $region26: #{tpu_custom_call.1} parent=1 // pred_check
      _
    $region27: #{tpu_custom_call.1} parent=1 // pred_check_branch
      %41 = sbr.rel (0) target = $region29
    $region28: #{tpu_custom_call.1} parent=1 // pred_region
      _
    $region29: #{tpu_custom_call.1} parent=1 // pred_fallthru
      _
    // Predicated region
    $region30: #{tpu_custom_call.1} parent=1 // pred_check
      _
    $region31: #{tpu_custom_call.1} parent=1 // pred_check_branch
      %43 = sbr.rel (0) target = $region33
    $region32: #{tpu_custom_call.1} parent=1 // pred_region
      _
    $region33: #{tpu_custom_call.1} parent=1 // pred_fallthru
      _
    // Predicated region
    $region34: #{tpu_custom_call.1} parent=1 // pred_check
      _
    $region35: #{tpu_custom_call.1} parent=1 // pred_check_branch
      %45 = sbr.rel (0) target = $region37
    $region36: #{tpu_custom_call.1} parent=1 // pred_region
      _
    $region37: #{tpu_custom_call.1} parent=1 // pred_fallthru
      _
    // Predicated region
    $region38: #{tpu_custom_call.1} parent=1 // pred_check
      _
    $region39: #{tpu_custom_call.1} parent=1 // pred_check_branch
      %47 = sbr.rel (0) target = $region41
    $region40: #{tpu_custom_call.1} parent=1 // pred_region
      _
    $region41: #{tpu_custom_call.1} parent=1 // pred_fallthru
      _
    // Predicated region
    $region42: #{tpu_custom_call.1} parent=1 // pred_check
      _
    $region43: #{tpu_custom_call.1} parent=1 // pred_check_branch
      %49 = sbr.rel (0) target = $region45
    $region44: #{tpu_custom_call.1} parent=1 // pred_region
      _
    $region45: #{tpu_custom_call.1} parent=1 // pred_fallthru
      _
    // Predicated region
    $region46: #{tpu_custom_call.1} parent=1 // pred_check
      _
    $region47: #{tpu_custom_call.1} parent=1 // pred_check_branch
      %51 = sbr.rel (0) target = $region49
    $region48: #{tpu_custom_call.1} parent=1 // pred_region
      _
    $region49: #{tpu_custom_call.1} parent=1 // pred_fallthru
      _
    %v52 = vld [vmem:[%s0] sm:$0xff]
    %v53 = vld [vmem:[%s2] sm:$0xff]
    %v54 = vld [vmem:[%s2 + $0x8] sm:$0xff]
    %v55 = vld [vmem:[%s2 + $0x10] sm:$0xff]
    %v56 = vld [vmem:[%s2 + $0x18] sm:$0xff]
    %v57 = vld [vmem:[%s2 + $0x20] sm:$0xff]
    %v58 = vld [vmem:[%s2 + $0x28] sm:$0xff]
    %v59 = vld [vmem:[%s2 + $0x30] sm:$0xff]
    %v60 = vld [vmem:[%s2 + $0x38] sm:$0xff]
    %v61 = vld [vmem:[%s3] sm:$0x1]
    %v63 = vperm.slane %v61, 0
    %vm65 = vcmask 261120
    %v67 = vsel %vm65, %v52, 0
    %v70 = vsel %vm65, %v53, 0
    %v73 = vsel %vm65, %v54, 0
    %v76 = vsel %vm65, %v55, 0
    %v79 = vsel %vm65, %v56, 0
    %v82 = vsel %vm65, %v57, 0
    %v85 = vsel %vm65, %v58, 0
    %v88 = vsel %vm65, %v59, 0
    %v91 = vsel %vm65, %v60, 0
    %93 = vmatpush.xpose.msra.mxu0 0.0
    %94 = vmatpush.xpose.msra.mxu0 0.0
    %95 = vmatpush.xpose.msra.mxu0 0.0
    %96 = vmatpush.xpose.msra.mxu0 0.0
    %97 = vmatpush.xpose.msra.mxu0 0.0
    %98 = vmatpush.xpose.msra.mxu0 0.0
    %99 = vmatpush.xpose.msra.mxu0 0.0
    %100 = vmatpush.xpose.msra.mxu0 0.0
    %101 = vmatpush.xpose.msra.mxu0 %v91
    %102 = vmatpush.xpose.msra.mxu0 %v88
    %103 = vmatpush.xpose.msra.mxu0 %v85
    %104 = vmatpush.xpose.msra.mxu0 %v82
    %105 = vmatpush.xpose.msra.mxu0 %v79
    %106 = vmatpush.xpose.msra.mxu0 %v76
    %107 = vmatpush.xpose.msra.mxu0 %v73
    %108 = vmatpush.xpose.msra.mxu0 %v70
    %109 = vmatmul.f32.gmra.mxu0 %v67
    %v110 = vpop.f32.mrf.mxu0
    %v111 = vadd.f32 %v63, %v110
    %112 = vdwg.mxu0
    %v113 = vmul.f32 %v111, 0.2
    %v114 = vmax.f32 %v111, %v113
    %v115 = vld [vmem:[%s4] sm:$0xff]
    %v116 = vld [vmem:[%s4 + $0x8] sm:$0xff]
    %v117 = vld [vmem:[%s5] sm:$0x1]
    %v119 = vperm.slane %v117, 0
    %vm121 = vcmask 523264
    %v123 = vsel %vm121, %v114, 0
    %v126 = vsel %vm121, %v115, 0
    %v129 = vsel %vm121, %v116, 0
    %131 = vmatpush.xpose.msra.mxu0 0.0
    %132 = vmatpush.xpose.msra.mxu0 0.0
    %133 = vmatpush.xpose.msra.mxu0 0.0
    %134 = vmatpush.xpose.msra.mxu0 0.0
    %135 = vmatpush.xpose.msra.mxu0 0.0
    %136 = vmatpush.xpose.msra.mxu0 0.0
    %137 = vmatpush.xpose.msra.mxu0 0.0
    %138 = vmatpush.xpose.msra.mxu0 0.0
    %139 = vmatpush.xpose.msra.mxu0 0.0
    %140 = vmatpush.xpose.msra.mxu0 0.0
    %141 = vmatpush.xpose.msra.mxu0 0.0
    %142 = vmatpush.xpose.msra.mxu0 0.0
    %143 = vmatpush.xpose.msra.mxu0 0.0
    %144 = vmatpush.xpose.msra.mxu0 0.0
    %145 = vmatpush.xpose.msra.mxu0 %v129
    %146 = vmatpush.xpose.msra.mxu0 %v126
    %147 = vmatmul.f32.gmra.mxu0 %v123
    %v148 = vpop.f32.mrf.mxu0
    %v149 = vadd.f32 %v119, %v148
    %150 = vdwg.mxu0
    %v151 = vld [vmem:[%s6] sm:$0xff]
    %v152 = vld [vmem:[%s6 + $0x8] sm:$0xff]
    %v153 = vld [vmem:[%s7] sm:$0x1]
    %v155 = vperm.slane %v153, 0
    %v158 = vsel %vm121, %v151, 0
    %v161 = vsel %vm121, %v152, 0
    %163 = vmatpush.xpose.msra.mxu0 0.0
    %164 = vmatpush.xpose.msra.mxu0 0.0
    %165 = vmatpush.xpose.msra.mxu0 0.0
    %166 = vmatpush.xpose.msra.mxu0 0.0
    %167 = vmatpush.xpose.msra.mxu0 0.0
    %168 = vmatpush.xpose.msra.mxu0 0.0
    %169 = vmatpush.xpose.msra.mxu0 0.0
    %170 = vmatpush.xpose.msra.mxu0 0.0
    %171 = vmatpush.xpose.msra.mxu0 0.0
    %172 = vmatpush.xpose.msra.mxu0 0.0
    %173 = vmatpush.xpose.msra.mxu0 0.0
    %174 = vmatpush.xpose.msra.mxu0 0.0
    %175 = vmatpush.xpose.msra.mxu0 0.0
    %176 = vmatpush.xpose.msra.mxu0 0.0
    %177 = vmatpush.xpose.msra.mxu0 %v161
    %178 = vmatpush.xpose.msra.mxu0 %v158
    %179 = vmatmul.f32.gmra.mxu0 %v123
    %v180 = vpop.f32.mrf.mxu0
    %v181 = vadd.f32 %v155, %v180
    %182 = vdwg.mxu0
    %v183 = vxor.u32 %v181, 2147483648
    %v184 = vmul.f32 %v183, 1.442695
    %v185 = vpow.pop %v184
    %v186 = vadd.f32 %v185, 1.0
    %v187 = vrcp.pop %v186
    %v188 = vmul.f32 %v186, %v187
    %v189 = vsub.f32 1.0, %v188
    %v190 = vmul.f32 %v187, %v189
    %v191 = vadd.f32 %v187, %v190
    %vm192 = vweird.f32 %v186
    %vm193 = vweird.f32 %v187
    %vm194 = vmor %vm192, %vm193
    %v195 = vsel %vm194, %v187, %v191
    %v196 = vand.u32 2147483647, %v186
    %vm197 = vcmp.eq.f32.partialorder %v196, 8.507059e+37
    %v198 = vand.u32 %v186, 2147483648
    %v199 = vor.u32 1.1754944e-38, %v198
    %v200 = vsel %vm197, %v199, %v195
    %v201 = vmul.f32 1.0, %v200
    %v202 = vld [vmem:[%s1] sm:$0xff]
    %v203 = vmul.f32 %v202, %v201
    %v204 = vadd.f32 %v203, %v149
    %v205 = vld [vmem:[%s8] sm:$0x1]
    %v207 = vperm.slane %v205, 0
    %v209 = vmul.f32 %v204, %v207
    %vm210 = vcmask 130048
    %v211 = vsel %vm210, %v209, 0.0
    %212 = vadd.xlane.f32.xlu0 %v211
    %v213 = vpop.xlane.xlu0 %212
    %v214 = vld [vmem:[#allocation2] sm:$0x1]
    %v216 = vperm.slane %v214, 0
    %v218 = vadd.f32 %v213, %v216
    %v219 = vld [vmem:[%s10] sm:$0xff]
    %v220 = vld [vmem:[%s10 + $0x8] sm:$0x3]
    %v221 = vld [vmem:[%s11] sm:$0x1]
    %v223 = vperm.slane %v221, 0
    %v226 = vsel %vm210, %v149, 0
    %v229 = vsel %vm210, %v219, 0
    %v232 = vsel %vm210, %v220, 0
    %234 = vmatpush.xpose.msra.mxu0 0.0
    %235 = vmatpush.xpose.msra.mxu0 0.0
    %236 = vmatpush.xpose.msra.mxu0 0.0
    %237 = vmatpush.xpose.msra.mxu0 0.0
    %238 = vmatpush.xpose.msra.mxu0 0.0
    %239 = vmatpush.xpose.msra.mxu0 0.0
    %240 = vmatpush.xpose.msra.mxu0 0.0
    %241 = vmatpush.xpose.msra.mxu0 0.0
    %242 = vmatpush.xpose.msra.mxu0 0.0
    %243 = vmatpush.xpose.msra.mxu0 0.0
    %244 = vmatpush.xpose.msra.mxu0 0.0
    %245 = vmatpush.xpose.msra.mxu0 0.0
    %246 = vmatpush.xpose.msra.mxu0 0.0
    %247 = vmatpush.xpose.msra.mxu0 0.0
    %248 = vmatpush.xpose.msra.mxu0 %v232
    %249 = vmatpush.xpose.msra.mxu0 %v229
    %250 = vmatmul.f32.gmra.mxu0 %v226
    %v251 = vpop.f32.mrf.mxu0
    %v252 = vadd.f32 %v223, %v251
    %253 = vdwg.mxu0
    %vm254 = vcmask 80896
    %v255 = vsel %vm254, %v252, -inf
    %256 = vmax.xlane.f32.xlu0 %v255
    %v257 = vpop.xlane.xlu0 %256
    %v258 = vsub.f32 %v252, %v257
    %v259 = vmul.f32 %v258, 1.442695
    %v260 = vpow.pop %v259
    %v261 = vsel %vm254, %v260, 0.0
    %262 = vadd.xlane.f32.xlu0 %v261
    %v263 = vpop.xlane.xlu0 %262
    %v264 = vlog2.pop %v263
    %v265 = vmul.f32 %v264, 0.6931472
    %v266 = vsub.f32 %v258, %v265
    %v267 = vxor.u32 %v204, 2147483648
    %v268 = vmul.f32 %v267, 1.442695
    %v269 = vpow.pop %v268
    %v270 = vadd.f32 %v269, 1.0
    %v271 = vrcp.pop %v270
    %v272 = vmul.f32 %v270, %v271
    %v273 = vsub.f32 1.0, %v272
    %v274 = vmul.f32 %v271, %v273
    %v275 = vadd.f32 %v271, %v274
    %vm276 = vweird.f32 %v270
    %vm277 = vweird.f32 %v271
    %vm278 = vmor %vm276, %vm277
    %v279 = vsel %vm278, %v271, %v275
    %v280 = vand.u32 2147483647, %v270
    %vm281 = vcmp.eq.f32.partialorder %v280, 8.507059e+37
    %v282 = vand.u32 %v270, 2147483648
    %v283 = vor.u32 1.1754944e-38, %v282
    %v284 = vsel %vm281, %v283, %v279
    %v285 = vmul.f32 1.0, %v284
    %286 = vst.msk [vmem:[#allocation3] sm:$0xff] %vm210, %v149
    %287 = vst.msk [vmem:[#allocation5] sm:$0xff] %vm210, %v201
    %vm288 = vcmask 7168
    %289 = vst.msk [vmem:[%s14] sm:$0xff] %vm288, %v218
    %290 = vst.msk [vmem:[#allocation7] sm:$0xff] %vm254, %v266
    %291 = vst.msk [vmem:[#allocation8] sm:$0xff] %vm210, %v204
    %292 = vst.msk [vmem:[#allocation10] sm:$0xff] %vm210, %v285
    // Predicated region
    $region50: #{tpu_custom_call.1} parent=1 // pred_check
      _
    $region51: #{tpu_custom_call.1} parent=1 // pred_check_branch
      %294 = sbr.rel (0) target = $region53
    $region52: #{tpu_custom_call.1} parent=1 // pred_region
      %296 = vsyncadd [#allocation4], 0
      %s298 = sshll.u32 [#allocation3], 4
      %s299 = int_to_ptr.vmem [resolvable:$true] %s298
      %s300 = sshll.u32 %s12, 4
      %s301 = int_to_ptr.hbm [resolvable:$true] %s300
      %303 = dma.vmem_to_hbm [thread:$0]  %s299, 128, %s301, [#allocation4]
    $region53: #{tpu_custom_call.1} parent=1 // pred_fallthru
      _
    // Predicated region
    $region54: #{tpu_custom_call.1} parent=1 // pred_check
      _
    $region55: #{tpu_custom_call.1} parent=1 // pred_check_branch
      %305 = sbr.rel (0) target = $region57
    $region56: #{tpu_custom_call.1} parent=1 // pred_region
      %307 = vsyncadd [#allocation6], 0
      %s309 = sshll.u32 [#allocation5], 4
      %s310 = int_to_ptr.vmem [resolvable:$true] %s309
      %s311 = sshll.u32 %s13, 4
      %s312 = int_to_ptr.hbm [resolvable:$true] %s311
      %314 = dma.vmem_to_hbm [thread:$0]  %s310, 128, %s312, [#allocation6]
    $region57: #{tpu_custom_call.1} parent=1 // pred_fallthru
      _
    // Predicated region
    $region58: #{tpu_custom_call.1} parent=1 // pred_check
      _
    $region59: #{tpu_custom_call.1} parent=1 // pred_check_branch
      %316 = sbr.rel (0) target = $region61
    $region60: #{tpu_custom_call.1} parent=1 // pred_region
      _
    $region61: #{tpu_custom_call.1} parent=1 // pred_fallthru
      _
    // Predicated region
    $region62: #{tpu_custom_call.1} parent=1 // pred_check
      _
    $region63: #{tpu_custom_call.1} parent=1 // pred_check_branch
      %318 = sbr.rel (0) target = $region65
    $region64: #{tpu_custom_call.1} parent=1 // pred_region
      %320 = vsyncadd [#allocation6], 0
      %s322 = sshll.u32 [#allocation7], 4
      %s323 = int_to_ptr.vmem [resolvable:$true] %s322
      %s324 = sshll.u32 %s15, 4
      %s325 = int_to_ptr.hbm [resolvable:$true] %s324
      %327 = dma.vmem_to_hbm [thread:$0]  %s323, 128, %s325, [#allocation6]
    $region65: #{tpu_custom_call.1} parent=1 // pred_fallthru
      _
    // Predicated region
    $region66: #{tpu_custom_call.1} parent=1 // pred_check
      _
    $region67: #{tpu_custom_call.1} parent=1 // pred_check_branch
      %329 = sbr.rel (0) target = $region69
    $region68: #{tpu_custom_call.1} parent=1 // pred_region
      %331 = vsyncadd [#allocation9], 0
      %s333 = sshll.u32 [#allocation8], 4
      %s334 = int_to_ptr.vmem [resolvable:$true] %s333
      %s335 = sshll.u32 %s16, 4
      %s336 = int_to_ptr.hbm [resolvable:$true] %s335
      %338 = dma.vmem_to_hbm [thread:$0]  %s334, 128, %s336, [#allocation9]
    $region69: #{tpu_custom_call.1} parent=1 // pred_fallthru
      _
    // Predicated region
    $region70: #{tpu_custom_call.1} parent=1 // pred_check
      _
    $region71: #{tpu_custom_call.1} parent=1 // pred_check_branch
      %340 = sbr.rel (0) target = $region73
    $region72: #{tpu_custom_call.1} parent=1 // pred_region
      %342 = vsyncadd [#allocation9], 0
      %s344 = sshll.u32 [#allocation10], 4
      %s345 = int_to_ptr.vmem [resolvable:$true] %s344
      %s346 = sshll.u32 %s17, 4
      %s347 = int_to_ptr.hbm [resolvable:$true] %s346
      %349 = dma.vmem_to_hbm [thread:$0]  %s345, 128, %s347, [#allocation9]
    $region73: #{tpu_custom_call.1} parent=1 // pred_fallthru
      _
    // Predicated region
    $region74: #{tpu_custom_call.1} parent=1 // pred_check
      _
    $region75: #{tpu_custom_call.1} parent=1 // pred_check_branch
      %351 = sbr.rel (0) target = $region77
    $region76: #{tpu_custom_call.1} parent=1 // pred_region
      %353 = dma.done [#allocation4], 128
    $region77: #{tpu_custom_call.1} parent=1 // pred_fallthru
      _
    // Predicated region
    $region78: #{tpu_custom_call.1} parent=1 // pred_check
      _
    $region79: #{tpu_custom_call.1} parent=1 // pred_check_branch
      %355 = sbr.rel (0) target = $region81
    $region80: #{tpu_custom_call.1} parent=1 // pred_region
      %357 = dma.done [#allocation6], 128
    $region81: #{tpu_custom_call.1} parent=1 // pred_fallthru
      _
    // Predicated region
    $region82: #{tpu_custom_call.1} parent=1 // pred_check
      _
    $region83: #{tpu_custom_call.1} parent=1 // pred_check_branch
      %359 = sbr.rel (0) target = $region85
    $region84: #{tpu_custom_call.1} parent=1 // pred_region
      _
    $region85: #{tpu_custom_call.1} parent=1 // pred_fallthru
      _
    // Predicated region
    $region86: #{tpu_custom_call.1} parent=1 // pred_check
      _
    $region87: #{tpu_custom_call.1} parent=1 // pred_check_branch
      %361 = sbr.rel (0) target = $region89
    $region88: #{tpu_custom_call.1} parent=1 // pred_region
      %363 = dma.done [#allocation6], 128
    $region89: #{tpu_custom_call.1} parent=1 // pred_fallthru
      _
    // Predicated region
    $region90: #{tpu_custom_call.1} parent=1 // pred_check
      _
    $region91: #{tpu_custom_call.1} parent=1 // pred_check_branch
      %365 = sbr.rel (0) target = $region93
    $region92: #{tpu_custom_call.1} parent=1 // pred_region
      %367 = dma.done [#allocation9], 128
    $region93: #{tpu_custom_call.1} parent=1 // pred_fallthru
      _
    // Predicated region
    $region94: #{tpu_custom_call.1} parent=1 // pred_check
      _
    $region95: #{tpu_custom_call.1} parent=1 // pred_check_branch
      %369 = sbr.rel (0) target = $region97
    $region96: #{tpu_custom_call.1} parent=1 // pred_region
      %371 = dma.done [#allocation9], 128
    $region97: #{tpu_custom_call.1} parent=1 // pred_fallthru
      _
    %372 = vsyncpa [#allocation4], 1
    %373 = vsyncpa [#allocation6], 1
    %374 = vsyncpa [#allocation9], 1

</llo_original>
